<compile_context>
chip_gen: v7x
topology: tpu7x:2x2x1
jax: 0.10.0
libtpu: 0.0.40
codegen_flags: <defaults>
</compile_context>

<pallas_src>
import jax
import jax.numpy as jnp
from jax.experimental import pallas as pl
from jax.experimental.pallas import tpu as pltpu


def _round_up(x, m):
    return ((x + m - 1) // m) * m


def _make_kernel(w0, w1, true_b, true_c, true_t, block_b, block_t, inv_bc,
                 mask_rows, mask_time):
    def kernel(logit_ref, frame_ref, target_ref, out_ref, max_acc):
        # --- program ids only at the TOP LEVEL of the body (never inside pl.when) ---
        t = pl.program_id(1)
        n_t = pl.num_programs(1)
        if mask_rows:
            row_start = pl.program_id(0) * block_b   # traced scalar, closed over below
        t_start = t * block_t

        # ---- streamed time-max reduction (native dtype, no upcast) ----
        @pl.when(t == 0)
        def _init():
            max_acc[...] = jnp.full(max_acc.shape, -jnp.inf, max_acc.dtype)

        fw = frame_ref[...]                                  # (block_b, block_t, C)
        if mask_time:
            # Trailing (out-of-range) frames must be forced to -inf BEFORE the max:
            # OOB garbage can contain NaN and jnp.maximum would propagate it.
            t_idx = jax.lax.broadcasted_iota(jnp.int32, fw.shape, 1) + t_start
            fw = jnp.where(t_idx < true_t, fw, -jnp.inf)
        max_acc[...] = jnp.maximum(max_acc[...], jnp.max(fw, axis=1))

        # ---- finalize once per batch block: both loss terms + masked sums ----
        @pl.when(t == n_t - 1)
        def _finalize():
            x = logit_ref[...].astype(jnp.float32)           # (block_b, C)
            y = target_ref[...].astype(jnp.float32)

            # torch.where(input_ > 1, 1, input_) then BCEWithLogitsLoss (stable form):
            #   max(x, 0) - x*y + log1p(exp(-|x|))
            x = jnp.where(x > 1.0, 1.0, x)
            normal_elt = jnp.maximum(x, 0.0) - x * y + jnp.log1p(jnp.exp(-jnp.abs(x)))

            # BCELoss on framewise-max probabilities; PyTorch clamps log terms at -100.
            p = max_acc[...].astype(jnp.float32)
            log_p = jnp.maximum(jnp.log(p), -100.0)
            log_1mp = jnp.maximum(jnp.log1p(-p), -100.0)
            aux_elt = -(y * log_p + (1.0 - y) * log_1mp)

            if mask_rows:
                row = jax.lax.broadcasted_iota(jnp.int32, x.shape, 0) + row_start
                valid = row < true_b
                normal_elt = jnp.where(valid, normal_elt, 0.0)
                aux_elt = jnp.where(valid, aux_elt, 0.0)

            partial = (w0 * jnp.sum(normal_elt) + w1 * jnp.sum(aux_elt)) * inv_bc
            out_ref[...] = jnp.broadcast_to(partial, out_ref.shape).astype(out_ref.dtype)

    return kernel


def improved_panns_loss(logit, framewise_output, target, weights=(1.0, 1.0),
                        block_b=8, block_t=None,
                        frame_block_bytes=8 * 1024 * 1024):
    """Pallas TPU implementation of ImprovedPANNsLoss.forward (output_key='logit').

    frame_block_bytes sizes the streamed framewise tile (~8 MiB double-buffers safely
    within v7x's 64 MiB VMEM; can be raised to ~16 MiB on v5e/v6e's 128 MiB parts).
    framewise_output may be bfloat16 to halve HBM traffic (upcast only in the finalize).
    """
    B, C = logit.shape
    Bf, T, Cf = framewise_output.shape
    assert (Bf, Cf) == (B, C) and target.shape == (B, C)

    w0, w1 = float(weights[0]), float(weights[1])
    itemsize = jnp.dtype(framewise_output.dtype).itemsize

    # ---- batch blocking: block_b == B (single full block) or a multiple of 8 ----
    if block_b is None:
        block_b = 8
    if B <= block_b:
        block_b = B                                   # full-dim block, no row mask
    else:
        block_b = max(8, (block_b // 8) * 8)          # multiple of 8; cdiv + row mask

    # ---- time blocking: multiple of 8, sized so one frame tile ~= frame_block_bytes ----
    if block_t is None:
        block_t = frame_block_bytes // max(1, block_b * C * itemsize)
    block_t = max(8, (int(block_t) // 8) * 8)
    block_t = min(block_t, _round_up(T, 8))

    n_b = pl.cdiv(B, block_b)
    n_t = pl.cdiv(T, block_t)
    mask_rows = (B % block_b) != 0
    mask_time = (T % block_t) != 0

    kernel = _make_kernel(w0, w1, B, C, T, block_b, block_t,
                          1.0 / float(B * C), mask_rows, mask_time)

    # ---- VMEM limit from the actual footprint (double-buffered tiles + scratch) ----
    Cp = _round_up(C, 128)
    bb_pad = _round_up(block_b, 8)
    bt_pad = _round_up(block_t, 8)
    frame_tile = block_b * bt_pad * Cp * itemsize
    bc_tile = bb_pad * Cp * 4
    out_tile = 8 * 128 * 4
    scratch_bytes = bb_pad * Cp * itemsize
    vmem_needed = (2 * frame_tile + 2 * 2 * bc_tile + 2 * out_tile + scratch_bytes
                   + 8 * bb_pad * Cp * 4)             # headroom for finalize f32 temps
    vmem_limit = int(min(max(vmem_needed + (4 << 20), 32 << 20), 100 << 20))

    partials = pl.pallas_call(
        kernel,
        out_shape=jax.ShapeDtypeStruct((n_b, 8, 128), jnp.float32),
        grid_spec=pltpu.PrefetchScalarGridSpec(
            num_scalar_prefetch=0,
            grid=(n_b, n_t),
            in_specs=[
                pl.BlockSpec((block_b, C), lambda b, t: (b, 0)),              # logit
                pl.BlockSpec((block_b, block_t, C), lambda b, t: (b, t, 0)),  # frames
                pl.BlockSpec((block_b, C), lambda b, t: (b, 0)),              # target
            ],
            out_specs=pl.BlockSpec((1, 8, 128), lambda b, t: (b, 0, 0)),
            scratch_shapes=[pltpu.VMEM((block_b, C), framewise_output.dtype)],
        ),
        compiler_params=pltpu.CompilerParams(
            dimension_semantics=("parallel", "arbitrary"),
            vmem_limit_bytes=vmem_limit,
        ),
    )(logit, framewise_output, target)

    # Each batch block wrote one already-weighted, already-normalized partial.
    return jnp.sum(partials[:, 0, 0])


def _reference_loss(logit, framewise_output, target, weights=(1.0, 1.0)):
    # Pure-JAX reference mirroring the PyTorch module semantics (output_key='logit').
    x = jnp.where(logit > 1.0, jnp.ones_like(logit), logit).astype(jnp.float32)
    y = target.astype(jnp.float32)
    normal = jnp.mean(jnp.maximum(x, 0.0) - x * y + jnp.log1p(jnp.exp(-jnp.abs(x))))
    p = jnp.max(framewise_output.astype(jnp.float32), axis=1)
    aux = jnp.mean(-(y * jnp.maximum(jnp.log(p), -100.0)
                     + (1.0 - y) * jnp.maximum(jnp.log1p(-p), -100.0)))
    return weights[0] * normal + weights[1] * aux


if __name__ == "__main__":
    # Small shapes chosen to exercise every code path:
    #   B=12 with block_b=8  -> 2 batch blocks, last one partial (row masking)
    #   T=20 with block_t=8  -> 3 time blocks, last one partial (-inf time masking)
    #   C=16                 -> true-C (non-128) lane dimension, no HBM padding
    B, T, C = 12, 20, 16
    key = jax.random.PRNGKey(0)
    k1, k2, k3 = jax.random.split(key, 3)

    logit = 2.0 * jax.random.normal(k1, (B, C), dtype=jnp.float32)  # some logits > 1 (clamp path)
    # framewise outputs are post-sigmoid probabilities in (0, 1)
    framewise = jax.nn.sigmoid(jax.random.normal(k2, (B, T, C), dtype=jnp.float32))
    target = (jax.random.uniform(k3, (B, C)) > 0.5).astype(jnp.float32)

    loss = improved_panns_loss(logit, framewise, target, weights=(1.0, 1.0), block_t=8)
    loss = jax.block_until_ready(loss)

    ref = _reference_loss(logit, framewise, target, weights=(1.0, 1.0))
    assert jnp.allclose(loss, ref, atol=1e-5, rtol=1e-5), (loss, ref)

    print("KERNEL_OK")
</pallas_src>

<mosaic_0001>
module attributes {stable_mosaic.version = 11 : i64} {
  func.func @kernel(%arg0: i32, %arg1: i32, %arg2: memref<8x16xf32, #tpu.memory_space<vmem>>, %arg3: memref<8x8x16xf32, #tpu.memory_space<vmem>>, %arg4: memref<8x16xf32, #tpu.memory_space<vmem>>, %arg5: memref<1x8x128xf32, #tpu.memory_space<vmem>>, %arg6: memref<8x16xf32, #tpu.memory_space<vmem>>) attributes {dimension_semantics = [#tpu.dimension_semantics<parallel>, #tpu.dimension_semantics<arbitrary>], iteration_bounds = array<i64: 2, 3>, scalar_prefetch = 0 : i64, scratch_operands = 1 : i64, tpu.core_type = #tpu.core_type<tc>, window_params = [{transform_indices = @transform_0, window_bounds = array<i64: 8, 16>}, {transform_indices = @transform_1, window_bounds = array<i64: 8, 8, 16>}, {transform_indices = @transform_2, window_bounds = array<i64: 8, 16>}, {transform_indices = @transform_3, window_bounds = array<i64: 1, 8, 128>}]} {
    %c8_i32 = arith.constant 8 : i32
    %0 = arith.muli %arg0, %c8_i32 : i32
    %c8_i32_0 = arith.constant 8 : i32
    %1 = arith.muli %arg1, %c8_i32_0 : i32
    %c0_i32 = arith.constant 0 : i32
    %2 = arith.cmpi eq, %arg1, %c0_i32 : i32
    %3 = arith.extui %2 : i1 to i32
    %c0_i32_1 = arith.constant 0 : i32
    %4 = arith.cmpi ne, %3, %c0_i32_1 : i32
    scf.if %4 {
      %cst_10 = arith.constant 0xFF800000 : f32
      %20 = vector.broadcast %cst_10 : f32 to vector<8x16xf32>
      %c0_11 = arith.constant 0 : index
      %c0_12 = arith.constant 0 : index
      %21 = vector.load %arg6[%c0_11, %c0_12] : memref<8x16xf32, #tpu.memory_space<vmem>>, vector<8x16xf32>
      tpu.vector_store %arg6[%c0_11, %c0_12], %20 {strides = array<i32>} : memref<8x16xf32, #tpu.memory_space<vmem>>, vector<8x16xf32>,
    } else {
    }
    %c0 = arith.constant 0 : index
    %c0_2 = arith.constant 0 : index
    %c0_3 = arith.constant 0 : index
    %5 = vector.load %arg3[%c0, %c0_2, %c0_3] : memref<8x8x16xf32, #tpu.memory_space<vmem>>, vector<8x8x16xf32>
    %6 = tpu.iota {dimensions = array<i32: 1>} : vector<8x8x16xi32>
    %7 = vector.broadcast %1 : i32 to vector<8x8x16xi32>
    %8 = arith.addi %6, %7 : vector<8x8x16xi32>
    %c20_i32 = arith.constant 20 : i32
    %9 = vector.broadcast %c20_i32 : i32 to vector<8x8x16xi32>
    %10 = arith.cmpi slt, %8, %9 : vector<8x8x16xi32>
    %cst = arith.constant 0xFF800000 : f32
    %11 = vector.broadcast %cst : f32 to vector<8x8x16xf32>
    %12 = arith.select %10, %5, %11 : vector<8x8x16xi1>, vector<8x8x16xf32>
    %c0_4 = arith.constant 0 : index
    %c0_5 = arith.constant 0 : index
    %13 = vector.load %arg6[%c0_4, %c0_5] : memref<8x16xf32, #tpu.memory_space<vmem>>, vector<8x16xf32>
    %cst_6 = arith.constant dense<0xFF800000> : vector<8x16xf32>
    %14 = vector.multi_reduction <maximumf>, %12, %cst_6 [1] : vector<8x8x16xf32> to vector<8x16xf32>
    %15 = arith.maximumf %13, %14 : vector<8x16xf32>
    %c0_7 = arith.constant 0 : index
    %c0_8 = arith.constant 0 : index
    %16 = vector.load %arg6[%c0_7, %c0_8] : memref<8x16xf32, #tpu.memory_space<vmem>>, vector<8x16xf32>
    tpu.vector_store %arg6[%c0_7, %c0_8], %15 {strides = array<i32>} : memref<8x16xf32, #tpu.memory_space<vmem>>, vector<8x16xf32>,
    %c2_i32 = arith.constant 2 : i32
    %17 = arith.cmpi eq, %arg1, %c2_i32 : i32
    %18 = arith.extui %17 : i1 to i32
    %c0_i32_9 = arith.constant 0 : i32
    %19 = arith.cmpi ne, %18, %c0_i32_9 : i32
    scf.if %19 {
      %c0_10 = arith.constant 0 : index
      %c0_11 = arith.constant 0 : index
      %20 = vector.load %arg2[%c0_10, %c0_11] : memref<8x16xf32, #tpu.memory_space<vmem>>, vector<8x16xf32>
      %c0_12 = arith.constant 0 : index
      %c0_13 = arith.constant 0 : index
      %21 = vector.load %arg4[%c0_12, %c0_13] : memref<8x16xf32, #tpu.memory_space<vmem>>, vector<8x16xf32>
      %cst_14 = arith.constant 1.000000e+00 : f32
      %22 = vector.broadcast %cst_14 : f32 to vector<8x16xf32>
      %23 = arith.cmpf ogt, %20, %22 : vector<8x16xf32>
      %cst_15 = arith.constant 1.000000e+00 : f32
      %24 = vector.broadcast %cst_15 : f32 to vector<8x16xf32>
      %25 = arith.select %23, %24, %20 : vector<8x16xi1>, vector<8x16xf32>
      %cst_16 = arith.constant 0.000000e+00 : f32
      %26 = vector.broadcast %cst_16 : f32 to vector<8x16xf32>
      %27 = arith.maximumf %25, %26 : vector<8x16xf32>
      %28 = arith.mulf %25, %21 : vector<8x16xf32>
      %29 = arith.subf %27, %28 : vector<8x16xf32>
      %30 = math.absf %25 : vector<8x16xf32>
      %cst_17 = arith.constant 0.000000e+00 : f32
      %31 = vector.broadcast %cst_17 : f32 to vector<8x16xf32>
      %32 = arith.subf %31, %30 : vector<8x16xf32>
      %33 = math.exp %32 : vector<8x16xf32>
      %34 = math.log1p %33 : vector<8x16xf32>
      %35 = arith.addf %29, %34 : vector<8x16xf32>
      %c0_18 = arith.constant 0 : index
      %c0_19 = arith.constant 0 : index
      %36 = vector.load %arg6[%c0_18, %c0_19] : memref<8x16xf32, #tpu.memory_space<vmem>>, vector<8x16xf32>
      %37 = math.log %36 : vector<8x16xf32>
      %cst_20 = arith.constant -1.000000e+02 : f32
      %38 = vector.broadcast %cst_20 : f32 to vector<8x16xf32>
      %39 = arith.maximumf %37, %38 : vector<8x16xf32>
      %cst_21 = arith.constant 0.000000e+00 : f32
      %40 = vector.broadcast %cst_21 : f32 to vector<8x16xf32>
      %41 = arith.subf %40, %36 : vector<8x16xf32>
      %42 = math.log1p %41 : vector<8x16xf32>
      %cst_22 = arith.constant -1.000000e+02 : f32
      %43 = vector.broadcast %cst_22 : f32 to vector<8x16xf32>
      %44 = arith.maximumf %42, %43 : vector<8x16xf32>
      %45 = arith.mulf %21, %39 : vector<8x16xf32>
      %cst_23 = arith.constant 1.000000e+00 : f32
      %46 = vector.broadcast %cst_23 : f32 to vector<8x16xf32>
      %47 = arith.subf %46, %21 : vector<8x16xf32>
      %48 = arith.mulf %47, %44 : vector<8x16xf32>
      %49 = arith.addf %45, %48 : vector<8x16xf32>
      %cst_24 = arith.constant 0.000000e+00 : f32
      %50 = vector.broadcast %cst_24 : f32 to vector<8x16xf32>
      %51 = arith.subf %50, %49 : vector<8x16xf32>
      %52 = tpu.iota {dimensions = array<i32: 0>} : vector<8x16xi32>
      %53 = vector.broadcast %0 : i32 to vector<8x16xi32>
      %54 = arith.addi %52, %53 : vector<8x16xi32>
      %c12_i32 = arith.constant 12 : i32
      %55 = vector.broadcast %c12_i32 : i32 to vector<8x16xi32>
      %56 = arith.cmpi slt, %54, %55 : vector<8x16xi32>
      %cst_25 = arith.constant 0.000000e+00 : f32
      %57 = vector.broadcast %cst_25 : f32 to vector<8x16xf32>
      %58 = arith.select %56, %35, %57 : vector<8x16xi1>, vector<8x16xf32>
      %cst_26 = arith.constant 0.000000e+00 : f32
      %59 = vector.broadcast %cst_26 : f32 to vector<8x16xf32>
      %60 = arith.select %56, %51, %59 : vector<8x16xi1>, vector<8x16xf32>
      %61 = vector.shape_cast %58 : vector<8x16xf32> to vector<1x8x16xf32>
      %cst_27 = arith.constant dense<0.000000e+00> : vector<1xf32>
      %62 = vector.multi_reduction <add>, %61, %cst_27 [1, 2] : vector<1x8x16xf32> to vector<1xf32>
      %63 = vector.shape_cast %62 : vector<1xf32> to vector<1x1x1xf32>
      %64 = vector.extract %63[0, 0, 0] : f32 from vector<1x1x1xf32>
      %cst_28 = arith.constant 1.000000e+00 : f32
      %65 = arith.mulf %cst_28, %64 : f32
      %66 = vector.shape_cast %60 : vector<8x16xf32> to vector<1x8x16xf32>
      %cst_29 = arith.constant dense<0.000000e+00> : vector<1xf32>
      %67 = vector.multi_reduction <add>, %66, %cst_29 [1, 2] : vector<1x8x16xf32> to vector<1xf32>
      %68 = vector.shape_cast %67 : vector<1xf32> to vector<1x1x1xf32>
      %69 = vector.extract %68[0, 0, 0] : f32 from vector<1x1x1xf32>
      %cst_30 = arith.constant 1.000000e+00 : f32
      %70 = arith.mulf %cst_30, %69 : f32
      %71 = arith.addf %65, %70 : f32
      %cst_31 = arith.constant 0.00520833349 : f32
      %72 = arith.mulf %71, %cst_31 : f32
      %73 = vector.broadcast %72 : f32 to vector<1x8x128xf32>
      %c0_32 = arith.constant 0 : index
      %c0_33 = arith.constant 0 : index
      %c0_34 = arith.constant 0 : index
      %74 = vector.load %arg5[%c0_32, %c0_33, %c0_34] : memref<1x8x128xf32, #tpu.memory_space<vmem>>, vector<1x8x128xf32>
      tpu.vector_store %arg5[%c0_32, %c0_33, %c0_34], %73 {strides = array<i32>} : memref<1x8x128xf32, #tpu.memory_space<vmem>>, vector<1x8x128xf32>,
    } else {
    }
    return
  }
  func.func @transform_0(%arg0: i32, %arg1: i32) -> (i32, i32) {
    %c0_i32 = arith.constant 0 : i32
    %c0_i32_0 = arith.constant 0 : i32
    return %arg0, %c0_i32 : i32, i32
  }
  func.func @transform_1(%arg0: i32, %arg1: i32) -> (i32, i32, i32) {
    %c0_i32 = arith.constant 0 : i32
    %c0_i32_0 = arith.constant 0 : i32
    return %arg0, %arg1, %c0_i32 : i32, i32, i32
  }
  func.func @transform_2(%arg0: i32, %arg1: i32) -> (i32, i32) {
    %c0_i32 = arith.constant 0 : i32
    %c0_i32_0 = arith.constant 0 : i32
    return %arg0, %c0_i32 : i32, i32
  }
  func.func @transform_3(%arg0: i32, %arg1: i32) -> (i32, i32, i32) {
    %c0_i32 = arith.constant 0 : i32
    %c0_i32_0 = arith.constant 0 : i32
    %c0_i32_1 = arith.constant 0 : i32
    return %arg0, %c0_i32, %c0_i32_0 : i32, i32, i32
  }
}

</mosaic_0001>

<llo_original>
// kernel: tpu_custom_call.1
$region0: #{tpu_custom_call.1}
  #allocation0 [shape = 'u32[]', space=smem, size = 0x4, offset = 0x4, fixed_abs, tag = 'smem constant byte address 0x4 - core index']
  #allocation1 [shape = 'u32[144,128]{1,0:T(1,128)}', space=vmem, size = 0x12000, scoped, tag = 'internal scratch']
  #allocation2 [shape = 'f32[8,16]{1,0:T(8,128)}', space=vmem, size = 0x1000, scoped, tag = 'scratch operand']
  %s0 = inlined_call_operand.vmem [shape: f32[12,16], index: 0, kind: input, shape index: {}]
  %s1 = inlined_call_operand.vmem [shape: f32[12,20,16], index: 1, kind: input, shape index: {}]
  %s2 = inlined_call_operand.vmem [shape: f32[12,16], index: 2, kind: input, shape index: {}]
  %s3 = inlined_call_operand.hbm [shape: f32[2,8,128], index: 3, kind: output, shape index: {}]
  %s4 = sld [smem:[#allocation0]]
  $region105: #{tpu_custom_call.1} parent=0
    _
  %s6 = ssub.s32 1, %s4
  %s7 = scalar_select 0, %s6, %s4
  $region1: #{tpu_custom_call.1} parent=0
    #allocation3 [shape = 'u8[65536]{0}', space=vmem, size = 0x10000, scoped, tag = 'input window, operand 1']
    #allocation4 [shape = 'u8[8192]{0}', space=vmem, size = 0x2000, scoped, tag = 'output window, operand 0']
    #allocation5 [shape = 's32[2]{0}', space=sflag, size = 0x8, scoped, tag = 'scoped memory for tpu_custom_call.1']
    %8 = vsyncpa [#allocation5], 0
    %s9 = scalar_lea.sflag [#allocation5], 1
    %10 = vsyncpa %s9, 0
    loop: start=0, step=1, limit=8
    $region2: #{tpu_custom_call.1} parent=1 // loop_pre_header
      _
    $region3: #{tpu_custom_call.1} parent=1 // loop_header
      %s12 = sphi 0, %s16
      %p13 = scmp.ge.s32.totalorder %s12, 8
      %s19 = sphi 0, %s31
      %s20 = sphi 0, %s27
      %s21 = sphi 0, %s19
      %s22 = sphi 0, %s20
      %s23 = sphi 0, %s21
      %s24 = sphi 0, %s22
      %s34 = sphi 0, %s36
      %s37 = sphi 0, %s34
      %s38 = sphi 0, %s37
      %s54 = sphi 0, %s38
      %s62 = sphi 0, %s64
      %s65 = sphi 0, %s62
      %s66 = sphi 0, %s65
      %s82 = sphi 0, %s66
      %s88 = sphi 0, %s90
      %s91 = sphi 0, %s88
      %s92 = sphi 0, %s91
      %s108 = sphi 0, %s92
      %s114 = sphi 0, %s116
      %s117 = sphi 0, %s114
      %s118 = sphi 0, %s117
      %s134 = sphi 0, %s118
    $region4: #{tpu_custom_call.1} parent=1 // loop_header_branch
      %15 = sbr.rel (%p13) target = $region8
    $region5: #{tpu_custom_call.1} parent=1 // loop_body
      %s17 = ssub.s32 %s12, 1
      %s18 = ssub.s32 %s12, 2
      %s25 = sadd.s32 1, %s20
      %p26 = scmp.ge.s32.totalorder %s25, 3
      %s27 = scalar_select %p26, 0, %s25
      %s28 = sadd.s32 1, %s19
      %s29 = scalar_select %p26, %s28, %s19
      %p30 = scmp.ge.s32.totalorder %s29, 2
      %s31 = scalar_select %p30, 0, %s29
      %s32 = ssub.s32 %s19, %s31
      %p33 = scmp.eq.s32.totalorder %s32, 0
      %s35 = sadd.s32 %s34, 1
      %s36 = scalar_select %p33, %s34, %s35
      %p39 = pneg %p33
      %p40 = scmp.eq.s32.totalorder %s12, 5
      %p41 = por %p39, %p40
      %p42 = scmp.ne.s32.totalorder %s34, %s37
      %p43 = scmp.eq.s32.totalorder %s12, 0
      %p44 = por %p42, %p43
      %p45 = scmp.ne.s32.totalorder %s34, %s37
      %p46 = scmp.eq.s32.totalorder %s17, 5
      %p47 = por %p45, %p46
      %p48 = scmp.ne.s32.totalorder %s37, %s38
      %p49 = scmp.eq.s32.totalorder %s17, 0
      %p50 = por %p48, %p49
      %p51 = scmp.ne.s32.totalorder %s37, %s38
      %p52 = scmp.eq.s32.totalorder %s18, 5
      %p53 = por %p51, %p52
      %p55 = scmp.ne.s32.totalorder %s38, %s54
      %p56 = scmp.eq.s32.totalorder %s18, 0
      %p57 = por %p55, %p56
      %s58 = ssub.s32 %s19, %s31
      %s59 = ssub.s32 %s20, %s27
      %s60 = sor.u32 %s58, %s59
      %p61 = scmp.eq.s32.totalorder %s60, 0
      %s63 = sadd.s32 %s62, 1
      %s64 = scalar_select %p61, %s62, %s63
      %p67 = pneg %p61
      %p68 = scmp.eq.s32.totalorder %s12, 5
      %p69 = por %p67, %p68
      %p70 = scmp.ne.s32.totalorder %s62, %s65
      %p71 = scmp.eq.s32.totalorder %s12, 0
      %p72 = por %p70, %p71
      %p73 = scmp.ne.s32.totalorder %s62, %s65
      %p74 = scmp.eq.s32.totalorder %s17, 5
      %p75 = por %p73, %p74
      %p76 = scmp.ne.s32.totalorder %s65, %s66
      %p77 = scmp.eq.s32.totalorder %s17, 0
      %p78 = por %p76, %p77
      %p79 = scmp.ne.s32.totalorder %s65, %s66
      %p80 = scmp.eq.s32.totalorder %s18, 5
      %p81 = por %p79, %p80
      %p83 = scmp.ne.s32.totalorder %s66, %s82
      %p84 = scmp.eq.s32.totalorder %s18, 0
      %p85 = por %p83, %p84
      %s86 = ssub.s32 %s19, %s31
      %p87 = scmp.eq.s32.totalorder %s86, 0
      %s89 = sadd.s32 %s88, 1
      %s90 = scalar_select %p87, %s88, %s89
      %p93 = pneg %p87
      %p94 = scmp.eq.s32.totalorder %s12, 5
      %p95 = por %p93, %p94
      %p96 = scmp.ne.s32.totalorder %s88, %s91
      %p97 = scmp.eq.s32.totalorder %s12, 0
      %p98 = por %p96, %p97
      %p99 = scmp.ne.s32.totalorder %s88, %s91
      %p100 = scmp.eq.s32.totalorder %s17, 5
      %p101 = por %p99, %p100
      %p102 = scmp.ne.s32.totalorder %s91, %s92
      %p103 = scmp.eq.s32.totalorder %s17, 0
      %p104 = por %p102, %p103
      %p105 = scmp.ne.s32.totalorder %s91, %s92
      %p106 = scmp.eq.s32.totalorder %s18, 5
      %p107 = por %p105, %p106
      %p109 = scmp.ne.s32.totalorder %s92, %s108
      %p110 = scmp.eq.s32.totalorder %s18, 0
      %p111 = por %p109, %p110
      %s112 = ssub.s32 %s19, %s31
      %p113 = scmp.eq.s32.totalorder %s112, 0
      %s115 = sadd.s32 %s114, 1
      %s116 = scalar_select %p113, %s114, %s115
      %p119 = pneg %p113
      %p120 = scmp.eq.s32.totalorder %s12, 5
      %p121 = por %p119, %p120
      %p122 = scmp.ne.s32.totalorder %s114, %s117
      %p123 = scmp.eq.s32.totalorder %s12, 0
      %p124 = por %p122, %p123
      %p125 = scmp.ne.s32.totalorder %s114, %s117
      %p126 = scmp.eq.s32.totalorder %s17, 5
      %p127 = por %p125, %p126
      %p128 = scmp.ne.s32.totalorder %s117, %s118
      %p129 = scmp.eq.s32.totalorder %s17, 0
      %p130 = por %p128, %p129
      %p131 = scmp.ne.s32.totalorder %s117, %s118
      %p132 = scmp.eq.s32.totalorder %s18, 5
      %p133 = por %p131, %p132
      %p135 = scmp.ne.s32.totalorder %s118, %s134
      %p136 = scmp.eq.s32.totalorder %s18, 0
      %p137 = por %p135, %p136
      %p138 = scmp.le.s32.totalorder 1, %s12
      %p139 = scmp.lt.s32.totalorder %s12, 7
      %p140 = pnand %p138, %p139
      %p141 = pneg %p140
      // Predicated region
      $region9: #{tpu_custom_call.1} parent=5 // pred_check
        _
      $region10: #{tpu_custom_call.1} parent=5 // pred_check_branch
        %143 = sbr.rel (%p140) target = $region12
      $region11: #{tpu_custom_call.1} parent=5 // pred_region
        %s144 = ssub.s32 %s12, 1
      $region12: #{tpu_custom_call.1} parent=5 // pred_fallthru
        _
      %p145 = scmp.lt.s32.totalorder %s12, 6
      // Predicated region
      $region13: #{tpu_custom_call.1} parent=5 // pred_check
        %p146 = pneg %p145
      $region14: #{tpu_custom_call.1} parent=5 // pred_check_branch
        %148 = sbr.rel (%p146) target = $region16
      $region15: #{tpu_custom_call.1} parent=5 // pred_region
        // Predicated region
        $region17: #{tpu_custom_call.1} parent=15 // pred_check
          %p149 = pneg %p44
        $region18: #{tpu_custom_call.1} parent=15 // pred_check_branch
          %151 = sbr.rel (%p149) target = $region20
        $region19: #{tpu_custom_call.1} parent=15 // pred_region
          %p152 = scmp.lt.s32.totalorder %s19, 1
          %s153 = scalar_select %p152, %s19, 1
          %s154 = smul.addr %s153, 8
          %s155 = scalar_lea.vmem %s0, %s154
        $region20: #{tpu_custom_call.1} parent=15 // pred_fallthru
          _
        // Predicated region
        $region21: #{tpu_custom_call.1} parent=15 // pred_check
          %p156 = pneg %p72
        $region22: #{tpu_custom_call.1} parent=15 // pred_check_branch
          %158 = sbr.rel (%p156) target = $region24
        $region23: #{tpu_custom_call.1} parent=15 // pred_region
          %s159 = sand.u32 %s62, 1
          %s160 = sand.u32 %s62, 1
          %s161 = smul.addr %s160, 64
          %s162 = scalar_lea.vmem [#allocation3], %s161
          %s163 = smul.u32 8, %s19
          %s164 = ssub.s32 12, %s163
          %p165 = scmp.lt.s32.totalorder %s164, 8
          %s166 = scalar_select %p165, %s164, 8
          %s167 = smul.u32 128, %s166
          %p168 = scmp.ne.s32.totalorder 0, %s167
          %s169 = smul.addr %s163, 3
          %s170 = sadd.s32 %s20, %s169
          %s171 = smul.addr %s170, 8
          %s172 = scalar_lea.vmem %s1, %s171
          // Predicated region
          $region25: #{tpu_custom_call.1} parent=23 // pred_check
            %p173 = pneg %p168
          $region26: #{tpu_custom_call.1} parent=23 // pred_check_branch
            %175 = sbr.rel (%p173) target = $region28
          $region27: #{tpu_custom_call.1} parent=23 // pred_region
            // Predicated region
            $region29: #{tpu_custom_call.1} parent=27 // pred_check
              _
            $region30: #{tpu_custom_call.1} parent=27 // pred_check_branch
              %177 = sbr.rel (0) target = $region32
            $region31: #{tpu_custom_call.1} parent=27 // pred_region
              // Predicated region
              $region51: #{tpu_custom_call.1} parent=31 // pred_check
                _
              $region52: #{tpu_custom_call.1} parent=31 // pred_check_branch
                %240 = sbr.rel (0) target = $region54
              $region53: #{tpu_custom_call.1} parent=31 // pred_region
                %s241 = sshrl.u32 %s166, 3
                // While loop
                $region55: #{tpu_custom_call.1} parent=53 // loop_pre_header
                  _
                $region56: #{tpu_custom_call.1} parent=53 // loop_header
                  %s243 = sphi 0, %s245
                  %p244 = scmp.ge.s32.totalorder %s243, %s241
                  %s248 = sphi 0, %s269
                  %s249 = sphi %s172, %s272
                  %s250 = sphi %s162, %s273
                $region57: #{tpu_custom_call.1} parent=53 // loop_header_branch
                  %247 = sbr.rel (%p244) target = $region61
                $region58: #{tpu_custom_call.1} parent=53 // loop_body
                  %v251 = vld [vmem:[%s249] sm:$0xff]
                  %252 = vst [vmem:[%s250] sm:$0xff] %v251
                  %v253 = vld [vmem:[%s249 + $0x18] sm:$0xff]
                  %254 = vst [vmem:[%s250 + $0x8] sm:$0xff] %v253
                  %v255 = vld [vmem:[%s249 + $0x30] sm:$0xff]
                  %256 = vst [vmem:[%s250 + $0x10] sm:$0xff] %v255
                  %v257 = vld [vmem:[%s249 + $0x48] sm:$0xff]
                  %258 = vst [vmem:[%s250 + $0x18] sm:$0xff] %v257
                  %v259 = vld [vmem:[%s249 + $0x60] sm:$0xff]
                  %260 = vst [vmem:[%s250 + $0x20] sm:$0xff] %v259
                  %v261 = vld [vmem:[%s249 + $0x78] sm:$0xff]
                  %262 = vst [vmem:[%s250 + $0x28] sm:$0xff] %v261
                  %v263 = vld [vmem:[%s249 + $0x90] sm:$0xff]
                  %264 = vst [vmem:[%s250 + $0x30] sm:$0xff] %v263
                  %v265 = vld [vmem:[%s249 + $0xa8] sm:$0xff]
                  %266 = vst [vmem:[%s250 + $0x38] sm:$0xff] %v265
                  %s267 = sadd.s32 1, %s248
                  %p268 = scmp.ge.s32.totalorder %s267, %s241
                  %s269 = scalar_select %p268, 0, %s267
                  %s270 = smul.u32 %s269, 192
                  %s271 = smul.u32 %s269, 64
                  %s272 = scalar_lea.vmem %s172, %s270
                  %s273 = scalar_lea.vmem %s162, %s271 [#allocation3]
                $region59: #{tpu_custom_call.1} parent=53 // loop_footer
                  %s245 = sadd.s32 %s243, 1
                $region60: #{tpu_custom_call.1} parent=53 // loop_footer_branch
                  %242 = sbr.rel target = $region56
                $region61: #{tpu_custom_call.1} parent=53 // loop_exit
                  _
                %s274 = sshrl.u32 %s166, 3
                %s275 = sand.u32 %s166, 7
                %s276 = smul.u32 %s274, 8
                %s277 = smul.u32 24, %s276
                %s278 = scalar_lea.vmem %s172, %s277
                %s279 = smul.u32 8, %s276
                %s280 = scalar_lea.vmem %s162, %s279 [#allocation3]
                // While loop
                $region62: #{tpu_custom_call.1} parent=53 // loop_pre_header
                  _
                $region63: #{tpu_custom_call.1} parent=53 // loop_header
                  %s282 = sphi 0, %s284
                  %p283 = scmp.ge.s32.totalorder %s282, %s275
                  %s287 = sphi 0, %s294
                  %s288 = sphi %s278, %s297
                  %s289 = sphi %s280, %s298
                $region64: #{tpu_custom_call.1} parent=53 // loop_header_branch
                  %286 = sbr.rel (%p283) target = $region68
                $region65: #{tpu_custom_call.1} parent=53 // loop_body
                  %v290 = vld [vmem:[%s288] sm:$0xff]
                  %291 = vst [vmem:[%s289] sm:$0xff] %v290
                  %s292 = sadd.s32 1, %s287
                  %p293 = scmp.ge.s32.totalorder %s292, %s275
                  %s294 = scalar_select %p293, 0, %s292
                  %s295 = smul.u32 %s294, 24
                  %s296 = smul.u32 %s294, 8
                  %s297 = scalar_lea.vmem %s278, %s295
                  %s298 = scalar_lea.vmem %s280, %s296 [#allocation3]
                $region66: #{tpu_custom_call.1} parent=53 // loop_footer
                  %s284 = sadd.s32 %s282, 1
                $region67: #{tpu_custom_call.1} parent=53 // loop_footer_branch
                  %281 = sbr.rel target = $region63
                $region68: #{tpu_custom_call.1} parent=53 // loop_exit
                  _
              $region54: #{tpu_custom_call.1} parent=31 // pred_fallthru
                _
              // Predicated region
              $region69: #{tpu_custom_call.1} parent=31 // pred_check
                _
              $region70: #{tpu_custom_call.1} parent=31 // pred_check_branch
                %300 = sbr.rel target = $region72
              $region71: #{tpu_custom_call.1} parent=31 // pred_region
                _
              $region72: #{tpu_custom_call.1} parent=31 // pred_fallthru
                _
            $region32: #{tpu_custom_call.1} parent=27 // pred_fallthru
              _
            // Predicated region
            $region33: #{tpu_custom_call.1} parent=27 // pred_check
              _
            $region34: #{tpu_custom_call.1} parent=27 // pred_check_branch
              %179 = sbr.rel target = $region36
            $region35: #{tpu_custom_call.1} parent=27 // pred_region
              %s181 = sshrl.u32 %s166, 3
              // While loop
              $region37: #{tpu_custom_call.1} parent=35 // loop_pre_header
                _
              $region38: #{tpu_custom_call.1} parent=35 // loop_header
                %s183 = sphi 0, %s185
                %p184 = scmp.ge.s32.totalorder %s183, %s181
                %s188 = sphi 0, %s209
                %s189 = sphi %s172, %s212
                %s190 = sphi %s162, %s213
              $region39: #{tpu_custom_call.1} parent=35 // loop_header_branch
                %187 = sbr.rel (%p184) target = $region43
              $region40: #{tpu_custom_call.1} parent=35 // loop_body
                %v191 = vld [vmem:[%s189] sm:$0xff]
                %192 = vst [vmem:[%s190] sm:$0xff] %v191
                %v193 = vld [vmem:[%s189 + $0x18] sm:$0xff]
                %194 = vst [vmem:[%s190 + $0x8] sm:$0xff] %v193
                %v195 = vld [vmem:[%s189 + $0x30] sm:$0xff]
                %196 = vst [vmem:[%s190 + $0x10] sm:$0xff] %v195
                %v197 = vld [vmem:[%s189 + $0x48] sm:$0xff]
                %198 = vst [vmem:[%s190 + $0x18] sm:$0xff] %v197
                %v199 = vld [vmem:[%s189 + $0x60] sm:$0xff]
                %200 = vst [vmem:[%s190 + $0x20] sm:$0xff] %v199
                %v201 = vld [vmem:[%s189 + $0x78] sm:$0xff]
                %202 = vst [vmem:[%s190 + $0x28] sm:$0xff] %v201
                %v203 = vld [vmem:[%s189 + $0x90] sm:$0xff]
                %204 = vst [vmem:[%s190 + $0x30] sm:$0xff] %v203
                %v205 = vld [vmem:[%s189 + $0xa8] sm:$0xff]
                %206 = vst [vmem:[%s190 + $0x38] sm:$0xff] %v205
                %s207 = sadd.s32 1, %s188
                %p208 = scmp.ge.s32.totalorder %s207, %s181
                %s209 = scalar_select %p208, 0, %s207
                %s210 = smul.u32 %s209, 192
                %s211 = smul.u32 %s209, 64
                %s212 = scalar_lea.vmem %s172, %s210
                %s213 = scalar_lea.vmem %s162, %s211 [#allocation3]
              $region41: #{tpu_custom_call.1} parent=35 // loop_footer
                %s185 = sadd.s32 %s183, 1
              $region42: #{tpu_custom_call.1} parent=35 // loop_footer_branch
                %182 = sbr.rel target = $region38
              $region43: #{tpu_custom_call.1} parent=35 // loop_exit
                _
              %s214 = sshrl.u32 %s166, 3
              %s215 = sand.u32 %s166, 7
              %s216 = smul.u32 %s214, 8
              %s217 = smul.u32 24, %s216
              %s218 = scalar_lea.vmem %s172, %s217
              %s219 = smul.u32 8, %s216
              %s220 = scalar_lea.vmem %s162, %s219 [#allocation3]
              // While loop
              $region44: #{tpu_custom_call.1} parent=35 // loop_pre_header
                _
              $region45: #{tpu_custom_call.1} parent=35 // loop_header
                %s222 = sphi 0, %s224
                %p223 = scmp.ge.s32.totalorder %s222, %s215
                %s227 = sphi 0, %s234
                %s228 = sphi %s218, %s237
                %s229 = sphi %s220, %s238
              $region46: #{tpu_custom_call.1} parent=35 // loop_header_branch
                %226 = sbr.rel (%p223) target = $region50
              $region47: #{tpu_custom_call.1} parent=35 // loop_body
                %v230 = vld [vmem:[%s228] sm:$0xff]
                %231 = vst [vmem:[%s229] sm:$0xff] %v230
                %s232 = sadd.s32 1, %s227
                %p233 = scmp.ge.s32.totalorder %s232, %s215
                %s234 = scalar_select %p233, 0, %s232
                %s235 = smul.u32 %s234, 24
                %s236 = smul.u32 %s234, 8
                %s237 = scalar_lea.vmem %s218, %s235
                %s238 = scalar_lea.vmem %s220, %s236 [#allocation3]
              $region48: #{tpu_custom_call.1} parent=35 // loop_footer
                %s224 = sadd.s32 %s222, 1
              $region49: #{tpu_custom_call.1} parent=35 // loop_footer_branch
                %221 = sbr.rel target = $region45
              $region50: #{tpu_custom_call.1} parent=35 // loop_exit
                _
            $region36: #{tpu_custom_call.1} parent=27 // pred_fallthru
              _
          $region28: #{tpu_custom_call.1} parent=23 // pred_fallthru
            _
          %301 = vnop
        $region24: #{tpu_custom_call.1} parent=15 // pred_fallthru
          _
        // Predicated region
        $region73: #{tpu_custom_call.1} parent=15 // pred_check
          %p302 = pneg %p98
        $region74: #{tpu_custom_call.1} parent=15 // pred_check_branch
          %304 = sbr.rel (%p302) target = $region76
        $region75: #{tpu_custom_call.1} parent=15 // pred_region
          %p305 = scmp.lt.s32.totalorder %s19, 1
          %s306 = scalar_select %p305, %s19, 1
          %s307 = smul.addr %s306, 8
          %s308 = scalar_lea.vmem %s2, %s307
        $region76: #{tpu_custom_call.1} parent=15 // pred_fallthru
          _
      $region16: #{tpu_custom_call.1} parent=5 // pred_fallthru
        _
      %p309 = scmp.le.s32.totalorder 1, %s12
      %p310 = scmp.lt.s32.totalorder %s12, 7
      %p311 = pnand %p309, %p310
      %p312 = pneg %p311
      // Predicated region
      $region77: #{tpu_custom_call.1} parent=5 // pred_check
        _
      $region78: #{tpu_custom_call.1} parent=5 // pred_check_branch
        %314 = sbr.rel (%p311) target = $region80
      $region79: #{tpu_custom_call.1} parent=5 // pred_region
        %s315 = ssub.s32 %s12, 1
        %s316 = sand.u32 %s65, 1
        %s317 = sand.u32 %s65, 1
        %s318 = smul.addr %s317, 64
        %s319 = scalar_lea.vmem [#allocation3], %s318
        // Predicated region
        $region81: #{tpu_custom_call.1} parent=79 // pred_check
          %p320 = pneg %p78
        $region82: #{tpu_custom_call.1} parent=79 // pred_check_branch
          %322 = sbr.rel (%p320) target = $region84
        $region83: #{tpu_custom_call.1} parent=79 // pred_region
          _
        $region84: #{tpu_custom_call.1} parent=79 // pred_fallthru
          _
        %p323 = scmp.lt.s32.totalorder %s21, 1
        %s324 = scalar_select %p323, %s21, 1
        %s325 = smul.addr %s324, 8
        %s326 = scalar_lea.vmem %s0, %s325
        %p327 = pneg %p50
        %p328 = pneg %p47
        %s329 = sand.u32 %s65, 1
        %s330 = sand.u32 %s65, 1
        %s331 = smul.addr %s330, 64
        %s332 = scalar_lea.vmem [#allocation3], %s331
        %p333 = pneg %p78
        %p334 = pneg %p75
        %p335 = scmp.lt.s32.totalorder %s21, 1
        %s336 = scalar_select %p335, %s21, 1
        %s337 = smul.addr %s336, 8
        %s338 = scalar_lea.vmem %s2, %s337
        %p339 = pneg %p104
        %p340 = pneg %p101
        %p341 = pneg %p130
        %p342 = pneg %p127
        %s343 = sand.u32 %s117, 1
        %s344 = scalar_lea.sflag [#allocation5], %s343
        %s345 = sand.u32 %s117, 1
        %s346 = smul.addr %s345, 8
        %s347 = scalar_lea.vmem [#allocation4], %s346
        %p348 = scmp.lt.s32.totalorder %s21, 1
        %s349 = scalar_select %p348, %s21, 1
        %s350 = smul.addr %s349, 8
        %s351 = scalar_lea.vmem %s0, %s350
        %s352 = smul.u32 8, %s21
        %s353 = ssub.s32 12, %s352
        %p354 = scmp.lt.s32.totalorder %s353, 8
        %s355 = scalar_select %p354, %s353, 8
        %s356 = smul.u32 128, %s355
        %p357 = scmp.lt.s32.totalorder %s21, 1
        %s358 = scalar_select %p357, %s21, 1
        %s359 = smul.addr %s358, 8
        %s360 = scalar_lea.vmem %s2, %s359
        %s361 = smul.u32 %s21, 8
        %s362 = smul.u32 %s22, 8
        %p363 = scmp.eq.s32.totalorder %s22, 0
        // Predicated region
        $region85: #{tpu_custom_call.1} parent=79 // pred_check
          %p364 = pneg %p363
        $region86: #{tpu_custom_call.1} parent=79 // pred_check_branch
          %366 = sbr.rel (%p364) target = $region88
        $region87: #{tpu_custom_call.1} parent=79 // pred_region
          %vm367 = vcmask 130048
          %368 = vst.msk [vmem:[#allocation2] sm:$0xff] %vm367, -inf
        $region88: #{tpu_custom_call.1} parent=79 // pred_fallthru
          _
        %v369 = vld [vmem:[%s319] sm:$0xff]
        %v370 = vld [vmem:[%s319 + $0x8] sm:$0xff]
        %v371 = vld [vmem:[%s319 + $0x10] sm:$0xff]
        %v372 = vld [vmem:[%s319 + $0x18] sm:$0xff]
        %v373 = vld [vmem:[%s319 + $0x20] sm:$0xff]
        %v374 = vld [vmem:[%s319 + $0x28] sm:$0xff]
        %v375 = vld [vmem:[%s319 + $0x30] sm:$0xff]
        %v376 = vld [vmem:[%s319 + $0x38] sm:$0xff]
        %v377 = vlaneseq
        %v378 = vshrl.u32 %v377, 7
        %v379 = vstv %s362
        %v380 = vadd.s32 %v378, %v379
        %vm381 = vcmp.lt.s32.totalorder %v380, 20
        %v382 = vsel %vm381, %v369, -inf
        %v383 = vsel %vm381, %v370, -inf
        %v384 = vsel %vm381, %v371, -inf
        %v385 = vsel %vm381, %v372, -inf
        %v386 = vsel %vm381, %v373, -inf
        %v387 = vsel %vm381, %v374, -inf
        %v388 = vsel %vm381, %v375, -inf
        %v389 = vsel %vm381, %v376, -inf
        %v390 = vld [vmem:[#allocation2] sm:$0xff]
        %vm391 = vcmask 130048
        %v392 = vsel %vm391, %v382, -inf
        %v393 = vrot.slane %v392, 4
        %v394 = vmax.f32 %v392, %v393
        %v395 = vrot.slane %v394, 2
        %v396 = vmax.f32 %v394, %v395
        %v397 = vrot.slane %v396, 1
        %v398 = vmax.f32 %v396, %v397
        %v399 = vsel %vm391, %v383, -inf
        %v400 = vrot.slane %v399, 4
        %v401 = vmax.f32 %v399, %v400
        %v402 = vrot.slane %v401, 2
        %v403 = vmax.f32 %v401, %v402
        %v404 = vrot.slane %v403, 1
        %v405 = vmax.f32 %v403, %v404
        %v406 = vsel %vm391, %v384, -inf
        %v407 = vrot.slane %v406, 4
        %v408 = vmax.f32 %v406, %v407
        %v409 = vrot.slane %v408, 2
        %v410 = vmax.f32 %v408, %v409
        %v411 = vrot.slane %v410, 1
        %v412 = vmax.f32 %v410, %v411
        %v413 = vsel %vm391, %v385, -inf
        %v414 = vrot.slane %v413, 4
        %v415 = vmax.f32 %v413, %v414
        %v416 = vrot.slane %v415, 2
        %v417 = vmax.f32 %v415, %v416
        %v418 = vrot.slane %v417, 1
        %v419 = vmax.f32 %v417, %v418
        %v420 = vsel %vm391, %v386, -inf
        %v421 = vrot.slane %v420, 4
        %v422 = vmax.f32 %v420, %v421
        %v423 = vrot.slane %v422, 2
        %v424 = vmax.f32 %v422, %v423
        %v425 = vrot.slane %v424, 1
        %v426 = vmax.f32 %v424, %v425
        %v427 = vsel %vm391, %v387, -inf
        %v428 = vrot.slane %v427, 4
        %v429 = vmax.f32 %v427, %v428
        %v430 = vrot.slane %v429, 2
        %v431 = vmax.f32 %v429, %v430
        %v432 = vrot.slane %v431, 1
        %v433 = vmax.f32 %v431, %v432
        %v434 = vsel %vm391, %v388, -inf
        %v435 = vrot.slane %v434, 4
        %v436 = vmax.f32 %v434, %v435
        %v437 = vrot.slane %v436, 2
        %v438 = vmax.f32 %v436, %v437
        %v439 = vrot.slane %v438, 1
        %v440 = vmax.f32 %v438, %v439
        %v441 = vsel %vm391, %v389, -inf
        %v442 = vrot.slane %v441, 4
        %v443 = vmax.f32 %v441, %v442
        %v444 = vrot.slane %v443, 2
        %v445 = vmax.f32 %v443, %v444
        %v446 = vrot.slane %v445, 1
        %v447 = vmax.f32 %v445, %v446
        %vm456 = vcmask 1041409
        %v457 = vsel %vm456, %v405, %v398
        %vm458 = vcmask 1042434
        %v459 = vsel %vm458, %v412, %v457
        %vm460 = vcmask 1043459
        %v461 = vsel %vm460, %v419, %v459
        %vm462 = vcmask 1044484
        %v463 = vsel %vm462, %v426, %v461
        %vm464 = vcmask 1045509
        %v465 = vsel %vm464, %v433, %v463
        %vm466 = vcmask 1046534
        %v467 = vsel %vm466, %v440, %v465
        %vm468 = vcmask 1047559
        %v469 = vsel %vm468, %v447, %v467
        %v471 = vmax.f32 %v390, %v469
        %472 = vst.msk [vmem:[#allocation2] sm:$0xff] %vm391, %v471
        %p473 = scmp.eq.s32.totalorder %s22, 2
        // Predicated region
        $region89: #{tpu_custom_call.1} parent=79 // pred_check
          %p474 = pneg %p473
        $region90: #{tpu_custom_call.1} parent=79 // pred_check_branch
          %476 = sbr.rel (%p474) target = $region92
        $region91: #{tpu_custom_call.1} parent=79 // pred_region
          %v477 = vld [vmem:[%s351] sm:$0xff]
          %v478 = vld [vmem:[%s360] sm:$0xff]
          %vm479 = vcmp.gt.f32.partialorder %v477, 1.0
          %v480 = vsel %vm479, 1.0, %v477
          %v481 = vmax.f32 %v480, 0.0
          %v482 = vmul.f32 %v480, %v478
          %v483 = vsub.f32 %v481, %v482
          %v484 = vand.u32 2147483647, %v480
          %v485 = vsub.f32 0.0, %v484
          %v486 = vmul.f32 %v485, 1.442695
          %v487 = vpow.pop %v486
          %v488 = vadd.f32 %v487, 1.0
          %v489 = vlog2.pop %v488
          %v490 = vmul.f32 %v489, 0.6931472
          %v491 = vmul.f32 -0.5, %v487
          %v492 = vadd.f32 %v491, 1.0
          %v493 = vmul.f32 %v492, %v487
          %v494 = vand.u32 2147483647, %v487
          %vm495 = vcmp.lt.f32.partialorder %v494, 0.0004427343
          %v496 = vsel %vm495, %v493, %v490
          %v497 = vadd.f32 %v483, %v496
          %v498 = vld [vmem:[#allocation2] sm:$0xff]
          %v499 = vlog2.pop %v498
          %v500 = vmul.f32 %v499, 0.6931472
          %v501 = vmax.f32 %v500, -100.0
          %v502 = vsub.f32 0.0, %v498
          %v503 = vadd.f32 %v502, 1.0
          %v504 = vlog2.pop %v503
          %v505 = vmul.f32 %v504, 0.6931472
          %v506 = vmul.f32 -0.5, %v502
          %v507 = vadd.f32 %v506, 1.0
          %v508 = vmul.f32 %v507, %v502
          %v509 = vand.u32 2147483647, %v502
          %vm510 = vcmp.lt.f32.partialorder %v509, 0.0004427343
          %v511 = vsel %vm510, %v508, %v505
          %v512 = vmax.f32 %v511, -100.0
          %v513 = vmul.f32 %v478, %v501
          %v514 = vsub.f32 1.0, %v478
          %v515 = vmul.f32 %v514, %v512
          %v516 = vadd.f32 %v513, %v515
          %v517 = vsub.f32 0.0, %v516
          %v518 = vstv %s361
          %v519 = vadd.s32 %v378, %v518
          %vm520 = vcmp.lt.s32.totalorder %v519, 12
          %v521 = vsel %vm520, %v497, 0.0
          %v522 = vsel %vm520, %v517, 0.0
          %v523 = vsel %vm391, %v521, 0.0
          %524 = vadd.xlane.f32.xlu0 %v523
          %v525 = vpop.xlane.xlu0 %524
          %v526 = vrot.slane %v525, 4
          %v527 = vadd.f32 %v525, %v526
          %v528 = vrot.slane %v527, 2
          %v529 = vadd.f32 %v527, %v528
          %v530 = vrot.slane %v529, 1
          %v531 = vadd.f32 %v529, %v530
          %s532 = vtos %v531
          %v533 = vsel %vm391, %v522, 0.0
          %534 = vadd.xlane.f32.xlu0 %v533
          %v535 = vpop.xlane.xlu0 %534
          %v536 = vrot.slane %v535, 4
          %v537 = vadd.f32 %v535, %v536
          %v538 = vrot.slane %v537, 2
          %v539 = vadd.f32 %v537, %v538
          %v540 = vrot.slane %v539, 1
          %v541 = vadd.f32 %v539, %v540
          %s542 = vtos %v541
          %s543 = sadd.f32 %s532, %s542
          %s544 = smul.f32 %s543, 0.0052083335
          %v545 = vstv %s544
          %546 = vst [vmem:[%s347] sm:$0xff] %v545
        $region92: #{tpu_custom_call.1} parent=79 // pred_fallthru
          _
        %s547 = sand.u32 %s117, 1
        %s548 = scalar_lea.sflag [#allocation5], %s547
        %s549 = sand.u32 %s117, 1
        %s550 = smul.addr %s549, 8
        %s551 = scalar_lea.vmem [#allocation4], %s550
        // Predicated region
        $region93: #{tpu_custom_call.1} parent=79 // pred_check
          %p552 = pneg %p127
        $region94: #{tpu_custom_call.1} parent=79 // pred_check_branch
          %554 = sbr.rel (%p552) target = $region96
        $region95: #{tpu_custom_call.1} parent=79 // pred_region
          %s556 = ssub.s32 128, 128
          %557 = vsyncadd %s548, %s556
          %s558 = smul.addr %s21, 128
          %s559 = scalar_lea.hbm %s3, %s558
          %s561 = sshll.u32 %s551, 4
          %s562 = int_to_ptr.vmem [resolvable:$true] %s561
          %564 = dma.vmem_to_hbm [thread:$0]  %s562, 128, %s559, %s548
        $region96: #{tpu_custom_call.1} parent=79 // pred_fallthru
          _
      $region80: #{tpu_custom_call.1} parent=5 // pred_fallthru
        _
      %p565 = scmp.le.s32.totalorder 2, %s12
      // Predicated region
      $region97: #{tpu_custom_call.1} parent=5 // pred_check
        %p566 = pneg %p565
      $region98: #{tpu_custom_call.1} parent=5 // pred_check_branch
        %568 = sbr.rel (%p566) target = $region100
      $region99: #{tpu_custom_call.1} parent=5 // pred_region
        %s569 = ssub.s32 %s12, 2
        // Predicated region
        $region101: #{tpu_custom_call.1} parent=99 // pred_check
          %p570 = pneg %p133
        $region102: #{tpu_custom_call.1} parent=99 // pred_check_branch
          %572 = sbr.rel (%p570) target = $region104
        $region103: #{tpu_custom_call.1} parent=99 // pred_region
          %s573 = sand.u32 %s118, 1
          %s574 = scalar_lea.sflag [#allocation5], %s573
          %s575 = sand.u32 %s118, 1
          %s576 = smul.addr %s575, 8
          %s577 = scalar_lea.vmem [#allocation4], %s576
          %578 = dma.done %s574, 128
        $region104: #{tpu_custom_call.1} parent=99 // pred_fallthru
          _
      $region100: #{tpu_custom_call.1} parent=5 // pred_fallthru
        _
    $region6: #{tpu_custom_call.1} parent=1 // loop_footer
      %s16 = sadd.s32 1, %s12
    $region7: #{tpu_custom_call.1} parent=1 // loop_footer_branch
      %11 = sbr.rel target = $region3
    $region8: #{tpu_custom_call.1} parent=1 // loop_exit
      _
    %579 = vsyncpa [#allocation5], 1
    %s580 = scalar_lea.sflag [#allocation5], 1
    %581 = vsyncpa %s580, 1

</llo_original>
